<compile_context>
chip_gen: v7x
topology: tpu7x:2x2x1
jax: 0.10.0
libtpu: 0.0.40
codegen_flags: <defaults>
</compile_context>

<pallas_src>
import functools
import math

import jax
import jax.numpy as jnp
from jax.experimental import pallas as pl
from jax.experimental.pallas import tpu as pltpu


# ----------------------------------------------------------------------------
# Kernels
# ----------------------------------------------------------------------------
def _cosine_kernel_kacc(x_ref, wt_ref, invx_ref, invw_ref, o_ref, *, eps_sq):
    """3-D grid (i, j, k): accumulate the K reduction directly into o_ref."""
    k = pl.program_id(2)

    @pl.when(k == 0)
    def _init():
        o_ref[...] = jnp.zeros_like(o_ref)

    o_ref[...] += jnp.dot(x_ref[...], wt_ref[...],
                          preferred_element_type=jnp.float32)

    @pl.when(k == pl.num_programs(2) - 1)
    def _finalize():
        o_ref[...] = (o_ref[...] + eps_sq) * invw_ref[...] * invx_ref[...]


def _cosine_kernel_single(x_ref, wt_ref, invx_ref, invw_ref, o_ref, *, eps_sq):
    """2-D grid (i, j): whole K fits in one tile -> one dot + epilogue."""
    acc = jnp.dot(x_ref[...], wt_ref[...], preferred_element_type=jnp.float32)
    o_ref[...] = (acc + eps_sq) * invw_ref[...] * invx_ref[...]


# ----------------------------------------------------------------------------
# Wrapper
# ----------------------------------------------------------------------------
def _round_up(a, m):
    return (a + m - 1) // m * m


def _cdiv(a, b):
    return -(-a // b)


def _pick_tile(dim, cap, align):
    """Aligned tile <= ~cap chosen so padding to a tile multiple wastes at most
    ~one align-group per tile (avoids the min(cap, round_up(dim)) 2x blowup)."""
    dim_a = _round_up(dim, align)
    n_tiles = _cdiv(dim_a, cap)
    return _round_up(_cdiv(dim_a, n_tiles), align)


def cosine_similarity(x, weight, *, eps=1e-3, use_bf16_matmul=True,
                      tile_m=None, tile_n=None, tile_k=None):
    """x: (M, K), weight: (N, K) -> (M, N) cosine similarity (torch semantics).

    Note: with use_bf16_matmul=True the MXU dot runs in bf16 (f32 accumulate),
    ~1e-2 relative deviation from a pure-f32 reference; norms/epsilon stay f32.
    """
    M, K = x.shape
    N, K2 = weight.shape
    assert K == K2, (K, K2)
    eps_sq = float(eps) * float(eps)

    # --- norms: once, in f32, in the wrapper (mirrors the torch forward) -------
    x_f32 = x.astype(jnp.float32)
    w_f32 = weight.astype(jnp.float32)
    inv_x = jax.lax.rsqrt(jnp.sum(x_f32 * x_f32, axis=1, keepdims=True) + eps_sq)   # (M,1)
    inv_w = jax.lax.rsqrt(jnp.sum(w_f32 * w_f32, axis=1) + eps_sq)[None, :]          # (1,N)

    # --- MXU operands (bf16 by default; single fused cast+transpose pass) ------
    op_dtype = jnp.bfloat16 if use_bf16_matmul else jnp.float32
    xf = x.astype(op_dtype)                                  # (M, K)
    wt = jnp.transpose(weight, (1, 0)).astype(op_dtype)      # (K, N)

    # --- tiles: aligned, capped, bounded padding --------------------------------
    align_m = 16 if use_bf16_matmul else 8      # bf16 packs 16 rows / sublane group
    if tile_m is None:
        tile_m = _pick_tile(M, 512, align_m)
    if tile_n is None:
        tile_n = _pick_tile(N, 512, 128)
    if tile_k is None:
        tile_k = _pick_tile(K, 2048, 128)

    Mp = _round_up(M, tile_m)
    Np = _round_up(N, tile_n)
    Kp = _round_up(K, tile_k)

    # v7x megacore: make sure >= 2 parallel tiles exist when N is wide enough.
    if Mp // tile_m == 1 and Np // tile_n == 1 and Np >= 256:
        tile_n = _round_up(_cdiv(Np, 2), 128)
        Np = _round_up(N, tile_n)

    # --- zero padding (exact for the dot; padded inv entries are 0) ------------
    if (Mp, Kp) != (M, K):
        xf = jnp.pad(xf, ((0, Mp - M), (0, Kp - K)))
    if (Kp, Np) != (K, N):
        wt = jnp.pad(wt, ((0, Kp - K), (0, Np - N)))
    if Mp != M:
        inv_x = jnp.pad(inv_x, ((0, Mp - M), (0, 0)))
    if Np != N:
        inv_w = jnp.pad(inv_w, ((0, 0), (0, Np - N)))

    grid_m, grid_n, grid_k = Mp // tile_m, Np // tile_n, Kp // tile_k

    op_bytes = jnp.dtype(op_dtype).itemsize
    cost = pl.CostEstimate(
        flops=2 * Mp * Np * Kp,
        transcendentals=0,
        bytes_accessed=(Mp * Kp * grid_n + Kp * Np * grid_m) * op_bytes
        + Mp * Np * 4 + (Mp + Np) * 4,
    )

    if grid_k == 1:
        kernel = functools.partial(_cosine_kernel_single, eps_sq=eps_sq)
        grid = (grid_m, grid_n)
        in_specs = [
            pl.BlockSpec((tile_m, Kp), lambda i, j: (i, 0)),
            pl.BlockSpec((Kp, tile_n), lambda i, j: (0, j)),
            pl.BlockSpec((tile_m, 1), lambda i, j: (i, 0)),
            pl.BlockSpec((1, tile_n), lambda i, j: (0, j)),
        ]
        out_spec = pl.BlockSpec((tile_m, tile_n), lambda i, j: (i, j))
        dim_sem = ("parallel", "parallel")
    else:
        kernel = functools.partial(_cosine_kernel_kacc, eps_sq=eps_sq)
        grid = (grid_m, grid_n, grid_k)
        in_specs = [
            pl.BlockSpec((tile_m, tile_k), lambda i, j, k: (i, k)),
            pl.BlockSpec((tile_k, tile_n), lambda i, j, k: (k, j)),
            pl.BlockSpec((tile_m, 1), lambda i, j, k: (i, 0)),
            pl.BlockSpec((1, tile_n), lambda i, j, k: (0, j)),
        ]
        out_spec = pl.BlockSpec((tile_m, tile_n), lambda i, j, k: (i, j))
        dim_sem = ("parallel", "parallel", "arbitrary")

    out = pl.pallas_call(
        kernel,
        out_shape=jax.ShapeDtypeStruct((Mp, Np), jnp.float32),
        grid=grid,
        in_specs=in_specs,
        out_specs=out_spec,
        compiler_params=pltpu.CompilerParams(
            dimension_semantics=dim_sem,
            vmem_limit_bytes=40 * 1024 * 1024,   # safe on v5e (16 MiB default) and v7x (64 MiB phys)
        ),
        cost_estimate=cost,
    )(xf, wt, inv_x, inv_w)

    return out[:M, :N]


# ----------------------------------------------------------------------------
# Demo / self-check
# ----------------------------------------------------------------------------
if __name__ == "__main__":
    B, IN_F, OUT_F = 16, 64, 32
    EPS = 1e-3

    key = jax.random.PRNGKey(0)
    kx, kw = jax.random.split(key)
    x = jax.random.normal(kx, (B, IN_F), jnp.float32)
    # kaiming_uniform_(a=sqrt(5)) on a (out, in) weight -> U(-1/sqrt(in), 1/sqrt(in))
    bound = 1.0 / math.sqrt(IN_F)
    weight = jax.random.uniform(kw, (OUT_F, IN_F), jnp.float32, -bound, bound)

    fwd = jax.jit(lambda a, w: cosine_similarity(a, w, eps=EPS))
    out = jax.block_until_ready(fwd(x, weight))
    assert out.shape == (B, OUT_F), out.shape

    # pure-JAX reference mirroring the torch forward exactly (f32 everywhere)
    c = EPS * EPS
    ref = (x @ weight.T + c)
    ref = ref / jnp.sqrt(jnp.sum(weight * weight, axis=1) + c)[None, :]
    ref = ref / jnp.sqrt(jnp.sum(x * x, axis=1) + c)[:, None]
    max_err = float(jnp.max(jnp.abs(out - ref)))
    assert jnp.allclose(out, ref, atol=5e-2, rtol=5e-2), max_err

    print("KERNEL_OK")
</pallas_src>

<mosaic_0001>
module attributes {stable_mosaic.version = 11 : i64} {
  func.func @_cosine_kernel_single(%arg0: i32, %arg1: i32, %arg2: memref<16x128xbf16, #tpu.memory_space<vmem>>, %arg3: memref<128x128xbf16, #tpu.memory_space<vmem>>, %arg4: memref<16x1xf32, #tpu.memory_space<vmem>>, %arg5: memref<1x128xf32, #tpu.memory_space<vmem>>, %arg6: memref<16x128xf32, #tpu.memory_space<vmem>>) attributes {dimension_semantics = [#tpu.dimension_semantics<parallel>, #tpu.dimension_semantics<parallel>], iteration_bounds = array<i64: 1, 1>, scalar_prefetch = 0 : i64, scratch_operands = 0 : i64, tpu.core_type = #tpu.core_type<tc>, window_params = [{transform_indices = @transform_0, window_bounds = array<i64: 16, 128>}, {transform_indices = @transform_1, window_bounds = array<i64: 128, 128>}, {transform_indices = @transform_2, window_bounds = array<i64: 16, 1>}, {transform_indices = @transform_3, window_bounds = array<i64: 1, 128>}, {transform_indices = @transform_4, window_bounds = array<i64: 16, 128>}]} {
    %c0 = arith.constant 0 : index
    %c0_0 = arith.constant 0 : index
    %0 = vector.load %arg2[%c0, %c0_0] : memref<16x128xbf16, #tpu.memory_space<vmem>>, vector<16x128xbf16>
    %c0_1 = arith.constant 0 : index
    %c0_2 = arith.constant 0 : index
    %1 = vector.load %arg3[%c0_1, %c0_2] : memref<128x128xbf16, #tpu.memory_space<vmem>>, vector<128x128xbf16>
    %cst = arith.constant dense<0.000000e+00> : vector<16x128xf32>
    %2 = tpu.matmul %0, %1, %cst {dimension_numbers = #tpu.dot_dimension_numbers<[1], [0], [0], [1], [0, 0, 1, 1], [], []>} : vector<16x128xbf16>, vector<128x128xbf16>, vector<16x128xf32> -> vector<16x128xf32>
    %cst_3 = arith.constant 9.99999997E-7 : f32
    %3 = vector.broadcast %cst_3 : f32 to vector<16x128xf32>
    %4 = arith.addf %2, %3 : vector<16x128xf32>
    %c0_4 = arith.constant 0 : index
    %c0_5 = arith.constant 0 : index
    %5 = vector.load %arg5[%c0_4, %c0_5] : memref<1x128xf32, #tpu.memory_space<vmem>>, vector<1x128xf32>
    %6 = vector.broadcast %5 : vector<1x128xf32> to vector<16x128xf32>
    %7 = arith.mulf %4, %6 : vector<16x128xf32>
    %c0_6 = arith.constant 0 : index
    %c0_7 = arith.constant 0 : index
    %8 = vector.load %arg4[%c0_6, %c0_7] : memref<16x1xf32, #tpu.memory_space<vmem>>, vector<16x1xf32>
    %9 = vector.broadcast %8 : vector<16x1xf32> to vector<16x128xf32>
    %10 = arith.mulf %7, %9 : vector<16x128xf32>
    %c0_8 = arith.constant 0 : index
    %c0_9 = arith.constant 0 : index
    %11 = vector.load %arg6[%c0_8, %c0_9] : memref<16x128xf32, #tpu.memory_space<vmem>>, vector<16x128xf32>
    tpu.vector_store %arg6[%c0_8, %c0_9], %10 {strides = array<i32>} : memref<16x128xf32, #tpu.memory_space<vmem>>, vector<16x128xf32>,
    return
  }
  func.func @transform_0(%arg0: i32, %arg1: i32) -> (i32, i32) {
    %c0_i32 = arith.constant 0 : i32
    %c0_i32_0 = arith.constant 0 : i32
    return %arg0, %c0_i32 : i32, i32
  }
  func.func @transform_1(%arg0: i32, %arg1: i32) -> (i32, i32) {
    %c0_i32 = arith.constant 0 : i32
    %c0_i32_0 = arith.constant 0 : i32
    return %c0_i32, %arg1 : i32, i32
  }
  func.func @transform_2(%arg0: i32, %arg1: i32) -> (i32, i32) {
    %c0_i32 = arith.constant 0 : i32
    %c0_i32_0 = arith.constant 0 : i32
    return %arg0, %c0_i32 : i32, i32
  }
  func.func @transform_3(%arg0: i32, %arg1: i32) -> (i32, i32) {
    %c0_i32 = arith.constant 0 : i32
    %c0_i32_0 = arith.constant 0 : i32
    return %c0_i32, %arg1 : i32, i32
  }
  func.func @transform_4(%arg0: i32, %arg1: i32) -> (i32, i32) {
    %c0_i32 = arith.constant 0 : i32
    return %arg0, %arg1 : i32, i32
  }
}

</mosaic_0001>

<llo_original>
// kernel: _lambda_.1
$region0: #{_lambda_.1}
  #allocation0 [shape = 'u32[]', space=smem, size = 0x4, offset = 0x4, fixed_abs, tag = 'smem constant byte address 0x4 - core index']
  #allocation1 [shape = 'u32[144,128]{1,0:T(1,128)}', space=vmem, size = 0x12000, scoped, tag = 'internal scratch']
  %s0 = inlined_call_operand.vmem [shape: bf16[16,128], index: 0, kind: input, shape index: {}]
  %s1 = inlined_call_operand.vmem [shape: bf16[128,128], index: 1, kind: input, shape index: {}]
  %s2 = inlined_call_operand.vmem [shape: f32[16,1], index: 2, kind: input, shape index: {}]
  %s3 = inlined_call_operand.vmem [shape: f32[1,128], index: 3, kind: input, shape index: {}]
  %s4 = inlined_call_operand.hbm [shape: f32[16,128], index: 4, kind: output, shape index: {}]
  %s5 = sld [smem:[#allocation0]]
  $region26: #{_lambda_.1} parent=0
    _
  %s7 = ssub.s32 1, %s5
  %s8 = scalar_select 0, %s7, %s5
  $region1: #{_lambda_.1} parent=0
    #allocation2 [shape = 'u8[8192]{0}', space=vmem, size = 0x2000, scoped, tag = 'output window, operand 0, single buffered']
    #allocation3 [shape = 's32[1]{0}', space=sflag, size = 0x4, scoped, tag = 'scoped memory for _lambda_.1']
    %9 = vsyncpa [#allocation3], 0
    // Predicated region
    $region2: #{_lambda_.1} parent=1 // pred_check
      _
    $region3: #{_lambda_.1} parent=1 // pred_check_branch
      %11 = sbr.rel (0) target = $region5
    $region4: #{_lambda_.1} parent=1 // pred_region
      _
    $region5: #{_lambda_.1} parent=1 // pred_fallthru
      _
    // Predicated region
    $region6: #{_lambda_.1} parent=1 // pred_check
      _
    $region7: #{_lambda_.1} parent=1 // pred_check_branch
      %13 = sbr.rel (0) target = $region9
    $region8: #{_lambda_.1} parent=1 // pred_region
      _
    $region9: #{_lambda_.1} parent=1 // pred_fallthru
      _
    // Predicated region
    $region10: #{_lambda_.1} parent=1 // pred_check
      _
    $region11: #{_lambda_.1} parent=1 // pred_check_branch
      %15 = sbr.rel (0) target = $region13
    $region12: #{_lambda_.1} parent=1 // pred_region
      _
    $region13: #{_lambda_.1} parent=1 // pred_fallthru
      _
    // Predicated region
    $region14: #{_lambda_.1} parent=1 // pred_check
      _
    $region15: #{_lambda_.1} parent=1 // pred_check_branch
      %17 = sbr.rel (0) target = $region17
    $region16: #{_lambda_.1} parent=1 // pred_region
      _
    $region17: #{_lambda_.1} parent=1 // pred_fallthru
      _
    %v19 = vld [vmem:[%s0] sm:$0xf]
    %v20 = vld [vmem:[%s0 + $0x4] sm:$0xf]
    %v21 = vld [vmem:[%s1] sm:$0xf]
    %v22 = vld [vmem:[%s1 + $0x4] sm:$0xf]
    %v23 = vld [vmem:[%s1 + $0x8] sm:$0xf]
    %v24 = vld [vmem:[%s1 + $0xc] sm:$0xf]
    %v25 = vld [vmem:[%s1 + $0x10] sm:$0xf]
    %v26 = vld [vmem:[%s1 + $0x14] sm:$0xf]
    %v27 = vld [vmem:[%s1 + $0x18] sm:$0xf]
    %v28 = vld [vmem:[%s1 + $0x1c] sm:$0xf]
    %v29 = vld [vmem:[%s1 + $0x20] sm:$0xf]
    %v30 = vld [vmem:[%s1 + $0x24] sm:$0xf]
    %v31 = vld [vmem:[%s1 + $0x28] sm:$0xf]
    %v32 = vld [vmem:[%s1 + $0x2c] sm:$0xf]
    %v33 = vld [vmem:[%s1 + $0x30] sm:$0xf]
    %v34 = vld [vmem:[%s1 + $0x34] sm:$0xf]
    %v35 = vld [vmem:[%s1 + $0x38] sm:$0xf]
    %v36 = vld [vmem:[%s1 + $0x3c] sm:$0xf]
    %v39 = vunpack.c.l.b16 %v19
    %v40 = vunpack.c.l.b16 %v20
    %v41 = vpack.c.b16 %v40, %v39
    %v59 = vunpack.c.l.b16 %v21
    %v60 = vunpack.c.l.b16 %v22
    %v61 = vunpack.c.l.b16 %v23
    %v62 = vunpack.c.l.b16 %v24
    %v63 = vunpack.c.l.b16 %v25
    %v64 = vunpack.c.l.b16 %v26
    %v65 = vunpack.c.l.b16 %v27
    %v66 = vunpack.c.l.b16 %v28
    %v67 = vunpack.c.l.b16 %v29
    %v68 = vunpack.c.l.b16 %v30
    %v69 = vunpack.c.l.b16 %v31
    %v70 = vunpack.c.l.b16 %v32
    %v71 = vunpack.c.l.b16 %v33
    %v72 = vunpack.c.l.b16 %v34
    %v73 = vunpack.c.l.b16 %v35
    %v74 = vunpack.c.l.b16 %v36
    %v75 = vpack.c.b16 %v60, %v59
    %v76 = vpack.c.b16 %v62, %v61
    %v77 = vpack.c.b16 %v64, %v63
    %v78 = vpack.c.b16 %v66, %v65
    %v79 = vpack.c.b16 %v68, %v67
    %v80 = vpack.c.b16 %v70, %v69
    %v81 = vpack.c.b16 %v72, %v71
    %v82 = vpack.c.b16 %v74, %v73
    %91 = vmatprep.subr.bf16.mxu0 0
    %92 = vmatpush1.bf16.msra.mxu0 %v75
    %93 = vmatprep.subr.bf16.mxu0 0
    %94 = vmatpush1.bf16.msra.mxu0 %v76
    %95 = vmatprep.subr.bf16.mxu0 0
    %96 = vmatpush1.bf16.msra.mxu0 %v77
    %97 = vmatprep.subr.bf16.mxu0 0
    %98 = vmatpush1.bf16.msra.mxu0 %v78
    %99 = vmatprep.subr.bf16.mxu0 0
    %100 = vmatpush1.bf16.msra.mxu0 %v79
    %101 = vmatprep.subr.bf16.mxu0 0
    %102 = vmatpush1.bf16.msra.mxu0 %v80
    %103 = vmatprep.subr.bf16.mxu0 0
    %104 = vmatpush1.bf16.msra.mxu0 %v81
    %105 = vmatprep.subr.bf16.mxu0 0
    %106 = vmatpush1.bf16.msra.mxu0 %v82
    %107 = vmatprep.subr.bf16.mxu0 0
    %108 = vmatpush1.bf16.msra.mxu0 0
    %109 = vmatprep.subr.bf16.mxu0 0
    %110 = vmatpush1.bf16.msra.mxu0 0
    %111 = vmatprep.subr.bf16.mxu0 0
    %112 = vmatpush1.bf16.msra.mxu0 0
    %113 = vmatprep.subr.bf16.mxu0 0
    %114 = vmatpush1.bf16.msra.mxu0 0
    %115 = vmatprep.subr.bf16.mxu0 0
    %116 = vmatpush1.bf16.msra.mxu0 0
    %117 = vmatprep.subr.bf16.mxu0 0
    %118 = vmatpush1.bf16.msra.mxu0 0
    %119 = vmatprep.subr.bf16.mxu0 0
    %120 = vmatpush1.bf16.msra.mxu0 0
    %121 = vmatprep.subr.bf16.mxu0 0
    %122 = vmatpush1.bf16.msra.mxu0 0
    %123 = vmatprep.mubr.bf16.mxu0 0
    %124 = vmatmul.mubr.bf16.gmra.mrb[0].mxu0 %v41
    %v125 = vpop.f32.mrb[0].mxu0
    %v126 = vadd.f32 1e-06, %v125
    %v127 = vpop.f32.mrb[0].mxu0
    %v128 = vpop.f32.mrb[0].mxu0
    %v129 = vadd.f32 1e-06, %v128
    %v130 = vpop.f32.mrb[0].mxu0
    %131 = vdwg.mxu0
    %v132 = vld [vmem:[%s3] sm:$0x1]
    %v134 = vlaneseq
    %v135 = vshrl.u32 %v134, 7
    %v136 = vsub.s32 0, %v135
    %v137 = vrot.slane %v132, %v136
    %v139 = vmul.f32 %v126, %v137
    %v140 = vmul.f32 %v129, %v137
    %v141 = vld [vmem:[%s2] sm:$0xff]
    %v142 = vld [vmem:[%s2 + $0x8] sm:$0xff]
    %144 = vset.pattern.permute.xlu0 0
    %145 = vperm.xlu0 %144, %v141
    %v146 = vpop.permute.xlu0 %145
    %149 = vset.pattern.permute.xlu0 0
    %150 = vperm.xlu0 %149, %v142
    %v151 = vpop.permute.xlu0 %150
    %v153 = vmul.f32 %v139, %v146
    %v154 = vmul.f32 %v140, %v151
    %155 = vst [vmem:[#allocation2] sm:$0xff] %v153
    %156 = vst [vmem:[#allocation2 + $0x8] sm:$0xff] %v154
    // Predicated region
    $region18: #{_lambda_.1} parent=1 // pred_check
      _
    $region19: #{_lambda_.1} parent=1 // pred_check_branch
      %158 = sbr.rel (0) target = $region21
    $region20: #{_lambda_.1} parent=1 // pred_region
      %s160 = ssub.s32 256, 256
      %161 = vsyncadd [#allocation3], %s160
      %s162 = sshll.u32 [#allocation2], 4
      %s163 = int_to_ptr.vmem [resolvable:$true] %s162
      %168 = dma.vmem_to_hbm [thread:$0]  %s163, 256, %s4, [#allocation3], 128, 128, 8
    $region21: #{_lambda_.1} parent=1 // pred_fallthru
      _
    // Predicated region
    $region22: #{_lambda_.1} parent=1 // pred_check
      _
    $region23: #{_lambda_.1} parent=1 // pred_check_branch
      %170 = sbr.rel (0) target = $region25
    $region24: #{_lambda_.1} parent=1 // pred_region
      %171 = dma.done [#allocation3], 256
    $region25: #{_lambda_.1} parent=1 // pred_fallthru
      _
    %172 = vsyncpa [#allocation3], 1

</llo_original>
